<compile_context>
chip_gen: v7x
topology: tpu7x:2x2x1
jax: 0.10.0
libtpu: 0.0.40
codegen_flags: <defaults>
</compile_context>

<pallas_src>
import numpy as np
import jax
import jax.numpy as jnp
from jax import lax
from jax.experimental import pallas as pl
from jax.experimental.pallas import tpu as pltpu

# ----------------------------- small config ---------------------------------
# Scaled-down CLIP: real model uses image 336 / patch 14 -> 24x24 patch grid.
# We keep the 24x24 grid (HD transform hard-codes 12 = 24//2) but shrink the
# patch to 2x2 so the image is 48x48.
PATCH = 2
IMG_SIZE = 48
NUM_CH = 3
H_GRID = IMG_SIZE // PATCH            # 24
GRID4 = H_GRID // 2                   # 12 (HD transform super-patch grid)
NUM_PATCHES = H_GRID * H_GRID         # 576
GROUPED = GRID4 * GRID4               # 144 rows per crop after 2x2 grouping
IMAGE_DIM_OUT = 32                    # C  (real model: 1024)
C4 = 4 * IMAGE_DIM_OUT                # 128 -> exactly one lane-width
K_GROUPED = 4 * NUM_CH * PATCH * PATCH  # 48 contraction dim (no padding)
HIDDEN = 128                          # dim_projection (real model: 3072)
VOCAB = 512
IMAGE_TOKEN_ID = 500
HD_CROP = 336                         # divisor used on image_sizes (PyTorch code)

CB_MAX = 8                            # max crops batched per patch-embed step
TM_CAP = 1024                         # max row tile for the projection MLP


def _round_up(x, m):
    return ((x + m - 1) // m) * m


def _ceil_div(a, b):
    return -(-a // b)


# ----------------------------- Pallas kernels -------------------------------
def _patch_embed_kernel(p_ref, w_ref, pos_ref, o_ref):
    # (CB*144, 48) bf16 @ (48, 128) bf16 on the MXU, f32 accumulate, fused
    # positional-embedding add in f32, lane-dense 128-wide bf16 stores.
    acc = jnp.dot(p_ref[...], w_ref[...], preferred_element_type=jnp.float32)
    o_ref[...] = (acc + pos_ref[...]).astype(o_ref.dtype)


def patch_embed_matmul(patches4, w4, pos4_tiled, cb):
    """patches4: (n_crops_padded*144, 48) bf16, w4: (48, 128) bf16 block-diag
    conv weight, pos4_tiled: (CB_MAX*144, 128) f32 (144-row periodic).
    Returns (n_crops_padded*144, 128) bf16 features (already in HD 4C order)."""
    R, K = patches4.shape
    rows = cb * GROUPED
    assert K == K_GROUPED and R % rows == 0 and cb <= CB_MAX
    n_steps = R // rows
    cost = pl.CostEstimate(
        flops=2 * R * K * C4,
        transcendentals=0,
        bytes_accessed=R * K * 2 + K * C4 * 2 + R * C4 * 4 + R * C4 * 2)
    return pl.pallas_call(
        _patch_embed_kernel,
        out_shape=jax.ShapeDtypeStruct((R, C4), jnp.bfloat16),
        grid=(n_steps,),
        in_specs=[pl.BlockSpec((rows, K), lambda i: (i, 0)),
                  pl.BlockSpec((K, C4), lambda i: (0, 0)),
                  # pos is 144-row periodic: always read the first cb*144 rows
                  pl.BlockSpec((rows, C4), lambda i: (0, 0))],
        out_specs=pl.BlockSpec((rows, C4), lambda i: (i, 0)),
        compiler_params=pltpu.CompilerParams(
            dimension_semantics=("parallel",)),
        cost_estimate=cost,
    )(patches4, w4, pos4_tiled)


def _proj_mlp_kernel(x_ref, w1_ref, b1_ref, w2_ref, b2_ref, o_ref):
    # Fused Linear -> GELU(erf, torch.nn.GELU default) -> Linear.
    # bf16 MXU operands, f32 accumulation, bias/GELU math in f32.
    x = x_ref[...]
    h = jnp.dot(x, w1_ref[...], preferred_element_type=jnp.float32) + b1_ref[...]
    h = 0.5 * h * (1.0 + lax.erf(h * 0.7071067811865476))
    h = h.astype(w2_ref.dtype)
    o_ref[...] = (jnp.dot(h, w2_ref[...], preferred_element_type=jnp.float32)
                  + b2_ref[...]).astype(o_ref.dtype)
    # TODO(synk): at real Phi-3 sizes (w1 4096x3072, w2 3072x3072) whole-weight
    # f32 residency is ~84 MiB and cannot fit v7x's 64 MiB VMEM.  Plan there:
    # bf16 weights (~42 MiB), keep w1 resident, stage h=(TM,3072) in an f32
    # VMEM scratch, add an N-tiling grid axis over w2's output dim (tn a
    # multiple of 256, e.g. 512, to keep the 2x256^2 MXU full and stores
    # lane-dense) and raise vmem_limit_bytes with headroom for the
    # double-buffered x/out tiles.  On v6e (128 MiB) bf16 whole-weight
    # residency is fine and no N-tiling is needed.


def img_projection_pallas(x, w1, b1, w2, b2, tm):
    """x: (Tp, 4C) bf16 with Tp a multiple of tm -> (Tp, HIDDEN) f32.
    One call per forward over all images' tokens; grid has >=2 steps so v7x
    megacore can split the 'parallel' axis across its two TensorCores."""
    T, D = x.shape
    H = w2.shape[1]
    assert T % tm == 0
    cost = pl.CostEstimate(
        flops=2 * T * D * H + 2 * T * H * H,
        transcendentals=T * H,
        bytes_accessed=(T * D * 2 + D * H * 2 + H * H * 2
                        + 2 * H * 4 + T * H * 4))
    return pl.pallas_call(
        _proj_mlp_kernel,
        out_shape=jax.ShapeDtypeStruct((T, H), jnp.float32),
        grid=(T // tm,),
        in_specs=[pl.BlockSpec((tm, D), lambda i: (i, 0)),
                  pl.BlockSpec(w1.shape, lambda i: (0, 0)),
                  pl.BlockSpec(b1.shape, lambda i: (0, 0)),
                  pl.BlockSpec(w2.shape, lambda i: (0, 0)),
                  pl.BlockSpec(b2.shape, lambda i: (0, 0))],
        out_specs=pl.BlockSpec((tm, H), lambda i: (i, 0)),
        compiler_params=pltpu.CompilerParams(
            dimension_semantics=("parallel",)),
        cost_estimate=cost,
    )(x, w1, b1, w2, b2)


# ----------------------------- module ---------------------------------------
class Phi3HDImageEmbeddingPallas:
    """JAX/Pallas re-implementation of Phi3HDImageEmbedding
    (hd_transform_order='glb_sub', type_feature='patch', layer_idx=-2)."""

    def __init__(self, key):
        ks = jax.random.split(key, 10)
        s = 0.02
        # CLIP patch-embedding conv weight, Conv2d OIHW: (C_out, C_in, ph, pw)
        self.patch_w = jax.random.normal(ks[0], (IMAGE_DIM_OUT, NUM_CH, PATCH, PATCH),
                                         jnp.float32) * s
        # CLS embedding kept for parameter parity; type_feature=='patch' drops
        # the CLS row and the ViT encoder is stubbed, so it never reaches output.
        self.class_emb = jax.random.normal(ks[1], (IMAGE_DIM_OUT,), jnp.float32) * s
        self.pos_emb = jax.random.normal(ks[2], (NUM_PATCHES + 1, IMAGE_DIM_OUT),
                                         jnp.float32) * s
        # HD-transform learnable separators (bf16: they feed the bf16 MXU path)
        self.glb_GN = (jax.random.normal(ks[3], (1, 1, C4), jnp.float32) * s
                       ).astype(jnp.bfloat16)
        self.sub_GN = (jax.random.normal(ks[4], (1, 1, 1, C4), jnp.float32) * s
                       ).astype(jnp.bfloat16)
        # img_projection: Linear(4C -> H), GELU, Linear(H -> H), weights (in, out).
        # Matmul weights in bf16 (MXU operands); biases stay f32.
        self.proj_w1 = (jax.random.normal(ks[5], (C4, HIDDEN), jnp.float32) * s
                        ).astype(jnp.bfloat16)
        self.proj_b1 = jax.random.normal(ks[6], (1, HIDDEN), jnp.float32) * s
        self.proj_w2 = (jax.random.normal(ks[7], (HIDDEN, HIDDEN), jnp.float32) * s
                        ).astype(jnp.bfloat16)
        self.proj_b2 = jax.random.normal(ks[8], (1, HIDDEN), jnp.float32) * s
        # wte: clamp_max(vocab_size) is inclusive -> vocab_size + 1 rows
        self.wte = jax.random.normal(ks[9], (VOCAB + 1, HIDDEN), jnp.float32) * s

        # --- derived, HD-grouped weights (built once) ---
        # Conv weight flattened (K=12, C=32), then block-diagonal (48, 128) so
        # one matmul row = one 2x2 patch group and the output is already in the
        # HD transform's 4C order, 128 lanes wide.  Stored bf16 (MXU operand).
        w = self.patch_w.reshape(IMAGE_DIM_OUT, -1).T            # (12, 32)
        self.patch_w4 = jax.scipy.linalg.block_diag(w, w, w, w).astype(jnp.bfloat16)
        # Positional embeddings (patch rows only) regrouped the same way, and
        # pre-tiled CB_MAX times so the kernel can add them to CB-crop blocks
        # without any per-call tile/reshape.  Kept f32 (add happens in f32).
        p = self.pos_emb[1:].reshape(H_GRID, H_GRID, IMAGE_DIM_OUT)
        p = p.reshape(GRID4, 2, GRID4, 2, IMAGE_DIM_OUT)
        p = jnp.transpose(p, (0, 2, 1, 3, 4)).reshape(GROUPED, C4)
        self.pos_emb4 = p                                         # (144, 128)
        self.pos_emb4_tiled = jnp.tile(p, (CB_MAX, 1))            # (1152, 128)

    # ---- im2col with the 2x2 HD grouping folded in ----
    @staticmethod
    def _im2col_grouped(img_embeds):
        """(N, 3, 48, 48) NCHW -> (N*144, 48).  Each row concatenates the
        channel-major im2col vectors of patches (2i,2j),(2i,2j+1),(2i+1,2j),
        (2i+1,2j+1), matching Conv2d OIHW flattening and the HD 4C order."""
        N = img_embeds.shape[0]
        x = img_embeds.reshape(N, NUM_CH, H_GRID, PATCH, H_GRID, PATCH)
        # -> (N, gi, gj, C, ph, pw): channel-major inside each patch
        x = jnp.transpose(x, (0, 2, 4, 1, 3, 5)).reshape(
            N, H_GRID, H_GRID, NUM_CH * PATCH * PATCH)
        # 2x2 spatial grouping: (N, 12, 2, 12, 2, 12) -> (N, 12, 12, 2, 2, 12)
        x = x.reshape(N, GRID4, 2, GRID4, 2, NUM_CH * PATCH * PATCH)
        x = jnp.transpose(x, (0, 1, 3, 2, 4, 5))
        return x.reshape(N * GROUPED, K_GROUPED)

    # ---- CLIP vision tower stand-in ----
    def get_img_features(self, img_embeds):
        """img_embeds: (N, 3, IMG, IMG) NCHW -> (n_rows, 4C) bf16 HD-grouped
        features, flat, n_rows >= N*144 (trailing rows belong to crop padding
        and are never referenced by the HD gather)."""
        N = img_embeds.shape[0]
        # Batch several crops per grid step; keep >= 2 steps for v7x megacore.
        cb = max(1, min(CB_MAX, _ceil_div(N, 2)))
        n_pad = (-N) % cb
        patches4 = self._im2col_grouped(img_embeds).astype(jnp.bfloat16)  # (N*144, 48)
        if n_pad:
            patches4 = jnp.pad(patches4, ((0, n_pad * GROUPED), (0, 0)))
        feats4 = patch_embed_matmul(patches4, self.patch_w4,
                                    self.pos_emb4_tiled, cb)
        # TODO(synk): the 24-layer CLIP ViT encoder (vision_feature_layer=-2) is
        # not implemented; this stand-in stops after patch+position embeddings
        # (the CLS token is dropped anyway by type_feature=='patch').
        return feats4                                             # ((N+pad)*144, 128)

    # ---- HD-transform as a precomputed row-index gather ----
    @staticmethod
    def _build_hd_indices(bs, crops_per_img, image_sizes, n_feat_rows):
        """Returns (per_image_index_arrays, per_image_lengths).  Indices point
        into [feat rows (crop-major, 144 rows each) ++ sub_GN ++ glb_GN ++ 0]."""
        sub_sep = n_feat_rows
        glb_sep = n_feat_rows + 1
        g = GRID4
        per_idx, per_len = [], []
        for b in range(bs):
            h = int(image_sizes[b, 0]) // HD_CROP
            w = int(image_sizes[b, 1]) // HD_CROP
            base = b * crops_per_img * GROUPED
            # global crop (crop 0): (12,12) grid, sub_GN after each grid row
            glb = base + (np.arange(g)[:, None] * g + np.arange(g)[None, :])
            glb = np.concatenate(
                [glb, np.full((g, 1), sub_sep, np.int64)], axis=1).reshape(-1)
            # sub crops: big (h*12, w*12) grid, sub_GN after each big row
            R = np.arange(h * g)[:, None]
            Cc = np.arange(w * g)[None, :]
            crop = 1 + (R // g) * w + (Cc // g)
            ric = (R % g) * g + (Cc % g)
            sub = base + crop * GROUPED + ric                     # (h*12, w*12)
            sub = np.concatenate(
                [sub, np.full((h * g, 1), sub_sep, np.int64)], axis=1).reshape(-1)
            # hd_transform_order == 'glb_sub'
            idx = np.concatenate([glb, np.array([glb_sep], np.int64), sub])
            expected = (h * w + 1) * GROUPED + 1 + (h + 1) * g
            assert idx.shape[0] == expected
            per_idx.append(idx.astype(np.int32))
            per_len.append(int(expected))
        return per_idx, per_len

    # ---- forward ----
    def forward(self, input_ids, pixel_values, image_sizes):
        # Host-side data-dependent control flow mirrors the PyTorch module
        # (positions / per-image crop counts); not jit-able by design.
        input_ids_np = np.asarray(input_ids).reshape(-1, np.asarray(input_ids).shape[-1])
        positions = np.argwhere(input_ids_np == IMAGE_TOKEN_ID)     # (n, 2)
        select = positions.shape[0] > 0

        img_set_tensor, num_img_tokens = [], []
        if select:
            bs = pixel_values.shape[0]
            crops_per_img = pixel_values.shape[1]
            flat = pixel_values.reshape((-1,) + pixel_values.shape[2:])
            feats_flat = self.get_img_features(flat)                 # (n_rows, 4C) bf16
            n_feat_rows = feats_flat.shape[0]
            # Source bank for the HD gather: features ++ sub_GN ++ glb_GN ++ zero.
            bank = jnp.concatenate(
                [feats_flat,
                 self.sub_GN.reshape(1, C4),
                 self.glb_GN.reshape(1, C4),
                 jnp.zeros((1, C4), feats_flat.dtype)], axis=0)
            per_idx, num_img_tokens = self._build_hd_indices(
                bs, crops_per_img, np.asarray(image_sizes), n_feat_rows)
            all_idx = np.concatenate(per_idx)
            T = int(all_idx.shape[0])
            # Row-tile selection: Tp = steps*TM, steps even and >= 2 (v7x
            # megacore), TM <= 1024.  Filler rows gather the zero row so the
            # MLP (erf) never sees uninitialized data; no pad/slice round trip.
            steps = max(2, _ceil_div(T, TM_CAP))
            if steps % 2:
                steps += 1
            TM = _round_up(_ceil_div(T, steps), 8)
            Tp = steps * TM
            if Tp > T:
                all_idx = np.concatenate(
                    [all_idx, np.full(Tp - T, n_feat_rows + 2, np.int32)])
            all_tokens = jnp.take(bank, jnp.asarray(all_idx), axis=0)  # (Tp, 4C) bf16
            # One fused Linear-GELU-Linear pallas_call for all images' tokens.
            proj_all = img_projection_pallas(all_tokens, self.proj_w1, self.proj_b1,
                                             self.proj_w2, self.proj_b2, TM)
            off = 0
            for ln in num_img_tokens:
                img_set_tensor.append(proj_all[off:off + ln])          # (T_i, HIDDEN)
                off += ln

        ids = jnp.clip(jnp.asarray(input_ids_np), 0, VOCAB)
        hidden_states = jnp.take(self.wte, ids, axis=0)                # (B, S, HIDDEN)

        if select:
            idx = 0
            for i, cnt in enumerate(num_img_tokens):
                b, p = int(positions[idx, 0]), int(positions[idx, 1])
                hidden_states = hidden_states.at[b, p:p + cnt].set(
                    img_set_tensor[i].astype(hidden_states.dtype))
                idx += cnt
        return jnp.squeeze(hidden_states, axis=0)


# ----------------------------- main ------------------------------------------
if __name__ == "__main__":
    key = jax.random.PRNGKey(0)
    k_mod, k_px, k_ids = jax.random.split(key, 3)

    model = Phi3HDImageEmbeddingPallas(k_mod)

    # one image, image_sizes = [336, 336] -> h = w = 1 -> 1 global + 1 sub crop
    bs, num_crops = 1, 2
    pixel_values = jax.random.normal(k_px, (bs, num_crops, NUM_CH, IMG_SIZE, IMG_SIZE),
                                     jnp.float32)
    image_sizes = np.array([[336, 336]], dtype=np.int64)

    # num image tokens for h=w=1: (1*1+1)*144 + 1 + (1+1)*12 = 313
    seq_len, img_pos, n_img_tok = 384, 10, 313
    ids = np.array(jax.random.randint(k_ids, (1, seq_len), 0, VOCAB), dtype=np.int32)
    ids[0, img_pos:img_pos + n_img_tok] = IMAGE_TOKEN_ID
    input_ids = jnp.asarray(ids)

    out = model.forward(input_ids, pixel_values, image_sizes)
    out = jax.block_until_ready(out)
    assert out.shape == (seq_len, HIDDEN), out.shape
    assert bool(jnp.all(jnp.isfinite(out)))
    print("KERNEL_OK")
</pallas_src>

<mosaic_0001>
module attributes {stable_mosaic.version = 11 : i64} {
  func.func @_patch_embed_kernel(%arg0: i32, %arg1: memref<144x48xbf16, #tpu.memory_space<vmem>>, %arg2: memref<48x128xbf16, #tpu.memory_space<vmem>>, %arg3: memref<144x128xf32, #tpu.memory_space<vmem>>, %arg4: memref<144x128xbf16, #tpu.memory_space<vmem>>) attributes {dimension_semantics = [#tpu.dimension_semantics<parallel>], iteration_bounds = array<i64: 2>, scalar_prefetch = 0 : i64, scratch_operands = 0 : i64, tpu.core_type = #tpu.core_type<tc>, window_params = [{transform_indices = @transform_0, window_bounds = array<i64: 144, 48>}, {pipeline_mode = #tpu.pipeline_mode<synchronous>, transform_indices = @transform_1, window_bounds = array<i64: 48, 128>}, {transform_indices = @transform_2, window_bounds = array<i64: 144, 128>}, {transform_indices = @transform_3, window_bounds = array<i64: 144, 128>}]} {
    %c0 = arith.constant 0 : index
    %c0_0 = arith.constant 0 : index
    %0 = vector.load %arg1[%c0, %c0_0] : memref<144x48xbf16, #tpu.memory_space<vmem>>, vector<144x48xbf16>
    %c0_1 = arith.constant 0 : index
    %c0_2 = arith.constant 0 : index
    %1 = vector.load %arg2[%c0_1, %c0_2] : memref<48x128xbf16, #tpu.memory_space<vmem>>, vector<48x128xbf16>
    %cst = arith.constant dense<0.000000e+00> : vector<144x128xf32>
    %2 = tpu.matmul %0, %1, %cst {dimension_numbers = #tpu.dot_dimension_numbers<[1], [0], [0], [1], [0, 0, 1, 1], [], []>} : vector<144x48xbf16>, vector<48x128xbf16>, vector<144x128xf32> -> vector<144x128xf32>
    %c0_3 = arith.constant 0 : index
    %c0_4 = arith.constant 0 : index
    %3 = vector.load %arg3[%c0_3, %c0_4] : memref<144x128xf32, #tpu.memory_space<vmem>>, vector<144x128xf32>
    %4 = arith.addf %2, %3 : vector<144x128xf32>
    %5 = arith.truncf %4 : vector<144x128xf32> to vector<144x128xbf16>
    %c0_5 = arith.constant 0 : index
    %c0_6 = arith.constant 0 : index
    %6 = vector.load %arg4[%c0_5, %c0_6] : memref<144x128xbf16, #tpu.memory_space<vmem>>, vector<144x128xbf16>
    tpu.vector_store %arg4[%c0_5, %c0_6], %5 {strides = array<i32>} : memref<144x128xbf16, #tpu.memory_space<vmem>>, vector<144x128xbf16>,
    return
  }
  func.func @transform_0(%arg0: i32) -> (i32, i32) {
    %c0_i32 = arith.constant 0 : i32
    %c0_i32_0 = arith.constant 0 : i32
    return %arg0, %c0_i32 : i32, i32
  }
  func.func @transform_1(%arg0: i32) -> (i32, i32) {
    %c0_i32 = arith.constant 0 : i32
    %c0_i32_0 = arith.constant 0 : i32
    %c0_i32_1 = arith.constant 0 : i32
    return %c0_i32, %c0_i32_0 : i32, i32
  }
  func.func @transform_2(%arg0: i32) -> (i32, i32) {
    %c0_i32 = arith.constant 0 : i32
    %c0_i32_0 = arith.constant 0 : i32
    %c0_i32_1 = arith.constant 0 : i32
    return %c0_i32, %c0_i32_0 : i32, i32
  }
  func.func @transform_3(%arg0: i32) -> (i32, i32) {
    %c0_i32 = arith.constant 0 : i32
    %c0_i32_0 = arith.constant 0 : i32
    return %arg0, %c0_i32 : i32, i32
  }
}

</mosaic_0001>

<llo_original>
// kernel: tpu_custom_call.1
$region0: #{tpu_custom_call.1}
  #allocation0 [shape = 'u32[]', space=smem, size = 0x4, offset = 0x4, fixed_abs, tag = 'smem constant byte address 0x4 - core index']
  #allocation1 [shape = 'u32[144,128]{1,0:T(1,128)}', space=vmem, size = 0x12000, scoped, tag = 'internal scratch']
  %s0 = inlined_call_operand.vmem [shape: bf16[288,48], index: 0, kind: input, shape index: {}]
  %s1 = inlined_call_operand.vmem [shape: bf16[48,128], index: 1, kind: input, shape index: {}]
  %s2 = inlined_call_operand.hbm [shape: f32[1152,128], index: 2, kind: input, shape index: {}]
  %s3 = inlined_call_operand.hbm [shape: bf16[288,128], index: 3, kind: output, shape index: {}]
  %s4 = sld [smem:[#allocation0]]
  $region49: #{tpu_custom_call.1} parent=0
    _
  %s6 = ssub.s32 1, %s4
  %s7 = scalar_select 0, %s6, %s4
  $region1: #{tpu_custom_call.1} parent=0
    #allocation2 [shape = 'u8[73728]{0}', space=vmem, size = 0x12000, scoped, tag = 'input window, operand 2, single buffered']
    #allocation3 [shape = 's32[2]{0}', space=sflag, size = 0x8, scoped, tag = 'scoped memory for tpu_custom_call.1']
    #allocation4 [shape = 's32[2]{0}', space=sflag, size = 0x8, scoped, tag = 'scoped memory for tpu_custom_call.1']
    #allocation5 [shape = 'u8[73728]{0}', space=vmem, size = 0x12000, scoped, tag = 'output window, operand 0']
    %8 = vsyncpa [#allocation3], 0
    %9 = vsyncpa [#allocation4], 0
    %s10 = scalar_lea.sflag [#allocation4], 1
    %11 = vsyncpa %s10, 0
    loop: start=0, step=1, limit=4
    $region2: #{tpu_custom_call.1} parent=1 // loop_pre_header
      _
    $region3: #{tpu_custom_call.1} parent=1 // loop_header
      %s13 = sphi 0, %s17
      %p14 = scmp.ge.s32.totalorder %s13, 4
      %s23 = sphi 0, %s25
      %s26 = sphi 0, %s23
      %s27 = sphi 0, %s26
      %s43 = sphi 0, %s27
      %s47 = sphi 0, %s47
      %s49 = sphi 0, %s47
      %s50 = sphi 0, %s49
      %s64 = sphi 0, %s50
      %s68 = sphi 0, %s68
      %s70 = sphi 0, %s68
      %s71 = sphi 0, %s70
      %s85 = sphi 0, %s71
      %s91 = sphi 0, %s93
      %s94 = sphi 0, %s91
      %s95 = sphi 0, %s94
      %s111 = sphi 0, %s95
    $region4: #{tpu_custom_call.1} parent=1 // loop_header_branch
      %16 = sbr.rel (%p14) target = $region8
    $region5: #{tpu_custom_call.1} parent=1 // loop_body
      %s18 = ssub.s32 %s13, 1
      %s19 = ssub.s32 %s13, 2
      %s20 = sadd.s32 %s13, 1
      %s21 = ssub.s32 %s13, %s20
      %p22 = scmp.eq.s32.totalorder %s21, 0
      %s24 = sadd.s32 %s23, 1
      %s25 = scalar_select %p22, %s23, %s24
      %p28 = pneg %p22
      %p29 = scmp.eq.s32.totalorder %s13, 1
      %p30 = por %p28, %p29
      %p31 = scmp.ne.s32.totalorder %s23, %s26
      %p32 = scmp.eq.s32.totalorder %s13, 0
      %p33 = por %p31, %p32
      %p34 = scmp.ne.s32.totalorder %s23, %s26
      %p35 = scmp.eq.s32.totalorder %s18, 1
      %p36 = por %p34, %p35
      %p37 = scmp.ne.s32.totalorder %s26, %s27
      %p38 = scmp.eq.s32.totalorder %s18, 0
      %p39 = por %p37, %p38
      %p40 = scmp.ne.s32.totalorder %s26, %s27
      %p41 = scmp.eq.s32.totalorder %s19, 1
      %p42 = por %p40, %p41
      %p44 = scmp.ne.s32.totalorder %s27, %s43
      %p45 = scmp.eq.s32.totalorder %s19, 0
      %p46 = por %p44, %p45
      %s48 = sadd.s32 %s47, 1
      %p51 = scmp.eq.s32.totalorder %s13, 1
      %p52 = scmp.ne.s32.totalorder %s47, %s49
      %p53 = scmp.eq.s32.totalorder %s13, 0
      %p54 = por %p52, %p53
      %p55 = scmp.ne.s32.totalorder %s47, %s49
      %p56 = scmp.eq.s32.totalorder %s18, 1
      %p57 = por %p55, %p56
      %p58 = scmp.ne.s32.totalorder %s49, %s50
      %p59 = scmp.eq.s32.totalorder %s18, 0
      %p60 = por %p58, %p59
      %p61 = scmp.ne.s32.totalorder %s49, %s50
      %p62 = scmp.eq.s32.totalorder %s19, 1
      %p63 = por %p61, %p62
      %p65 = scmp.ne.s32.totalorder %s50, %s64
      %p66 = scmp.eq.s32.totalorder %s19, 0
      %p67 = por %p65, %p66
      %s69 = sadd.s32 %s68, 1
      %p72 = scmp.eq.s32.totalorder %s13, 1
      %p73 = scmp.ne.s32.totalorder %s68, %s70
      %p74 = scmp.eq.s32.totalorder %s13, 0
      %p75 = por %p73, %p74
      %p76 = scmp.ne.s32.totalorder %s68, %s70
      %p77 = scmp.eq.s32.totalorder %s18, 1
      %p78 = por %p76, %p77
      %p79 = scmp.ne.s32.totalorder %s70, %s71
      %p80 = scmp.eq.s32.totalorder %s18, 0
      %p81 = por %p79, %p80
      %p82 = scmp.ne.s32.totalorder %s70, %s71
      %p83 = scmp.eq.s32.totalorder %s19, 1
      %p84 = por %p82, %p83
      %p86 = scmp.ne.s32.totalorder %s71, %s85
      %p87 = scmp.eq.s32.totalorder %s19, 0
      %p88 = por %p86, %p87
      %s89 = ssub.s32 %s13, %s20
      %p90 = scmp.eq.s32.totalorder %s89, 0
      %s92 = sadd.s32 %s91, 1
      %s93 = scalar_select %p90, %s91, %s92
      %p96 = pneg %p90
      %p97 = scmp.eq.s32.totalorder %s13, 1
      %p98 = por %p96, %p97
      %p99 = scmp.ne.s32.totalorder %s91, %s94
      %p100 = scmp.eq.s32.totalorder %s13, 0
      %p101 = por %p99, %p100
      %p102 = scmp.ne.s32.totalorder %s91, %s94
      %p103 = scmp.eq.s32.totalorder %s18, 1
      %p104 = por %p102, %p103
      %p105 = scmp.ne.s32.totalorder %s94, %s95
      %p106 = scmp.eq.s32.totalorder %s18, 0
      %p107 = por %p105, %p106
      %p108 = scmp.ne.s32.totalorder %s94, %s95
      %p109 = scmp.eq.s32.totalorder %s19, 1
      %p110 = por %p108, %p109
      %p112 = scmp.ne.s32.totalorder %s95, %s111
      %p113 = scmp.eq.s32.totalorder %s19, 0
      %p114 = por %p112, %p113
      %p115 = scmp.le.s32.totalorder 1, %s13
      %p116 = scmp.lt.s32.totalorder %s13, 3
      %p117 = pnand %p115, %p116
      %p118 = pneg %p117
      // Predicated region
      $region9: #{tpu_custom_call.1} parent=5 // pred_check
        _
      $region10: #{tpu_custom_call.1} parent=5 // pred_check_branch
        %120 = sbr.rel (%p117) target = $region12
      $region11: #{tpu_custom_call.1} parent=5 // pred_region
        %s121 = ssub.s32 %s13, 1
        // Predicated region
        $region13: #{tpu_custom_call.1} parent=11 // pred_check
          %p122 = pneg %p60
        $region14: #{tpu_custom_call.1} parent=11 // pred_check_branch
          %124 = sbr.rel (%p122) target = $region16
        $region15: #{tpu_custom_call.1} parent=11 // pred_region
          _
        $region16: #{tpu_custom_call.1} parent=11 // pred_fallthru
          _
        // Predicated region
        $region17: #{tpu_custom_call.1} parent=11 // pred_check
          %p125 = pneg %p81
        $region18: #{tpu_custom_call.1} parent=11 // pred_check_branch
          %127 = sbr.rel (%p125) target = $region20
        $region19: #{tpu_custom_call.1} parent=11 // pred_region
          %s129 = ssub.s32 2304, 2304
          %130 = vsyncadd [#allocation3], %s129
          %s131 = sshll.u32 [#allocation2], 4
          %s132 = int_to_ptr.vmem [resolvable:$true] %s131
          %137 = dma.hbm_to_vmem [thread:$0]  %s2, 2304, %s132, [#allocation3], 128, 128, 8
        $region20: #{tpu_custom_call.1} parent=11 // pred_fallthru
          _
      $region12: #{tpu_custom_call.1} parent=5 // pred_fallthru
        _
      %p138 = scmp.lt.s32.totalorder %s13, 2
      // Predicated region
      $region21: #{tpu_custom_call.1} parent=5 // pred_check
        %p139 = pneg %p138
      $region22: #{tpu_custom_call.1} parent=5 // pred_check_branch
        %141 = sbr.rel (%p139) target = $region24
      $region23: #{tpu_custom_call.1} parent=5 // pred_region
        // Predicated region
        $region25: #{tpu_custom_call.1} parent=23 // pred_check
          %p142 = pneg %p33
        $region26: #{tpu_custom_call.1} parent=23 // pred_check_branch
          %144 = sbr.rel (%p142) target = $region28
        $region27: #{tpu_custom_call.1} parent=23 // pred_region
          %s145 = smul.u32 18, %s13
          %p146 = scmp.lt.s32.totalorder %s145, 35
          %s147 = scalar_select %p146, %s145, 35
          %s148 = smul.addr %s147, 4
          %s149 = scalar_lea.vmem %s0, %s148
          %s150 = smul.u32 18, %s13
        $region28: #{tpu_custom_call.1} parent=23 // pred_fallthru
          _
      $region24: #{tpu_custom_call.1} parent=5 // pred_fallthru
        _
      %p151 = scmp.le.s32.totalorder 1, %s13
      %p152 = scmp.lt.s32.totalorder %s13, 3
      %p153 = pnand %p151, %p152
      %p154 = pneg %p153
      // Predicated region
      $region29: #{tpu_custom_call.1} parent=5 // pred_check
        _
      $region30: #{tpu_custom_call.1} parent=5 // pred_check_branch
        %156 = sbr.rel (%p153) target = $region32
      $region31: #{tpu_custom_call.1} parent=5 // pred_region
        %s157 = ssub.s32 %s13, 1
        // Predicated region
        $region33: #{tpu_custom_call.1} parent=31 // pred_check
          %p158 = pneg %p81
        $region34: #{tpu_custom_call.1} parent=31 // pred_check_branch
          %160 = sbr.rel (%p158) target = $region36
        $region35: #{tpu_custom_call.1} parent=31 // pred_region
          %161 = dma.done [#allocation3], 2304
        $region36: #{tpu_custom_call.1} parent=31 // pred_fallthru
          _
        %s162 = smul.u32 18, %s18
        %p163 = scmp.lt.s32.totalorder %s162, 35
        %s164 = scalar_select %p163, %s162, 35
        %s165 = smul.addr %s164, 4
        %s166 = scalar_lea.vmem %s0, %s165
        %p167 = pneg %p39
        %p168 = pneg %p36
        %p169 = pneg %p60
        %p170 = pneg %p57
        %p171 = pneg %p81
        %p172 = pneg %p78
        %p173 = pneg %p107
        %p174 = pneg %p104
        %s175 = sand.u32 %s94, 1
        %s176 = scalar_lea.sflag [#allocation4], %s175
        %s177 = sand.u32 %s94, 1
        %s178 = smul.addr %s177, 72
        %s179 = scalar_lea.vmem [#allocation5], %s178
        %s180 = smul.u32 18, %s18
        %p181 = scmp.lt.s32.totalorder %s180, 35
        %s182 = scalar_select %p181, %s180, 35
        %s183 = smul.addr %s182, 4
        %s184 = scalar_lea.vmem %s0, %s183
        %s185 = smul.u32 18, %s18
        %s186 = smul.u32 18, %s18
        %v188 = vld [vmem:[%s184] sm:$0xf]
        %v189 = vld [vmem:[%s184 + $0x4] sm:$0xf]
        %v190 = vld [vmem:[%s184 + $0x8] sm:$0xf]
        %v191 = vld [vmem:[%s184 + $0xc] sm:$0xf]
        %v192 = vld [vmem:[%s184 + $0x10] sm:$0xf]
        %v193 = vld [vmem:[%s184 + $0x14] sm:$0xf]
        %v194 = vld [vmem:[%s184 + $0x18] sm:$0xf]
        %v195 = vld [vmem:[%s184 + $0x1c] sm:$0xf]
        %v196 = vld [vmem:[%s184 + $0x20] sm:$0xf]
        %v197 = vld [vmem:[%s184 + $0x24] sm:$0xf]
        %v198 = vld [vmem:[%s184 + $0x28] sm:$0xf]
        %v199 = vld [vmem:[%s184 + $0x2c] sm:$0xf]
        %v200 = vld [vmem:[%s184 + $0x30] sm:$0xf]
        %v201 = vld [vmem:[%s184 + $0x34] sm:$0xf]
        %v202 = vld [vmem:[%s184 + $0x38] sm:$0xf]
        %v203 = vld [vmem:[%s184 + $0x3c] sm:$0xf]
        %v204 = vld [vmem:[%s184 + $0x40] sm:$0xf]
        %v205 = vld [vmem:[%s184 + $0x44] sm:$0xf]
        %v206 = vld [vmem:[%s1] sm:$0xf]
        %v207 = vld [vmem:[%s1 + $0x4] sm:$0xf]
        %v208 = vld [vmem:[%s1 + $0x8] sm:$0xf]
        %v209 = vld [vmem:[%s1 + $0xc] sm:$0xf]
        %v210 = vld [vmem:[%s1 + $0x10] sm:$0xf]
        %v211 = vld [vmem:[%s1 + $0x14] sm:$0xf]
        %v212 = vld [vmem:[#allocation2] sm:$0xff]
        %v213 = vld [vmem:[#allocation2 + $0x8] sm:$0xff]
        %v214 = vld [vmem:[#allocation2 + $0x10] sm:$0xff]
        %v215 = vld [vmem:[#allocation2 + $0x18] sm:$0xff]
        %v216 = vld [vmem:[#allocation2 + $0x20] sm:$0xff]
        %v217 = vld [vmem:[#allocation2 + $0x28] sm:$0xff]
        %v218 = vld [vmem:[#allocation2 + $0x30] sm:$0xff]
        %v219 = vld [vmem:[#allocation2 + $0x38] sm:$0xff]
        %v220 = vld [vmem:[#allocation2 + $0x40] sm:$0xff]
        %v221 = vld [vmem:[#allocation2 + $0x48] sm:$0xff]
        %v222 = vld [vmem:[#allocation2 + $0x50] sm:$0xff]
        %v223 = vld [vmem:[#allocation2 + $0x58] sm:$0xff]
        %v224 = vld [vmem:[#allocation2 + $0x60] sm:$0xff]
        %v225 = vld [vmem:[#allocation2 + $0x68] sm:$0xff]
        %v226 = vld [vmem:[#allocation2 + $0x70] sm:$0xff]
        %v227 = vld [vmem:[#allocation2 + $0x78] sm:$0xff]
        %v228 = vld [vmem:[#allocation2 + $0x80] sm:$0xff]
        %v229 = vld [vmem:[#allocation2 + $0x88] sm:$0xff]
        %v248 = vunpack.c.l.b16 %v188
        %v249 = vunpack.c.l.b16 %v189
        %v250 = vunpack.c.l.b16 %v190
        %v251 = vunpack.c.l.b16 %v191
        %v252 = vunpack.c.l.b16 %v192
        %v253 = vunpack.c.l.b16 %v193
        %v254 = vunpack.c.l.b16 %v194
        %v255 = vunpack.c.l.b16 %v195
        %v256 = vunpack.c.l.b16 %v196
        %v257 = vunpack.c.l.b16 %v197
        %v258 = vunpack.c.l.b16 %v198
        %v259 = vunpack.c.l.b16 %v199
        %v260 = vunpack.c.l.b16 %v200
        %v261 = vunpack.c.l.b16 %v201
        %v262 = vunpack.c.l.b16 %v202
        %v263 = vunpack.c.l.b16 %v203
        %v264 = vunpack.c.l.b16 %v204
        %v265 = vunpack.c.l.b16 %v205
        %v266 = vpack.c.b16 %v249, %v248
        %v267 = vpack.c.b16 %v251, %v250
        %v268 = vpack.c.b16 %v253, %v252
        %v269 = vpack.c.b16 %v255, %v254
        %v270 = vpack.c.b16 %v257, %v256
        %v271 = vpack.c.b16 %v259, %v258
        %v272 = vpack.c.b16 %v261, %v260
        %v273 = vpack.c.b16 %v263, %v262
        %v274 = vpack.c.b16 %v265, %v264
        %v281 = vunpack.c.l.b16 %v206
        %v282 = vunpack.c.l.b16 %v207
        %v283 = vunpack.c.l.b16 %v208
        %v284 = vunpack.c.l.b16 %v209
        %v285 = vunpack.c.l.b16 %v210
        %v286 = vunpack.c.l.b16 %v211
        %v287 = vpack.c.b16 %v282, %v281
        %v288 = vpack.c.b16 %v284, %v283
        %v289 = vpack.c.b16 %v286, %v285
        %vm293 = vcmask 392192
        %v295 = vsel %vm293, %v266, 0
        %v298 = vsel %vm293, %v267, 0
        %v301 = vsel %vm293, %v268, 0
        %v304 = vsel %vm293, %v269, 0
        %v307 = vsel %vm293, %v270, 0
        %v310 = vsel %vm293, %v271, 0
        %v313 = vsel %vm293, %v272, 0
        %v316 = vsel %vm293, %v273, 0
        %v319 = vsel %vm293, %v274, 0
        %321 = vmatprep.subr.bf16.mxu0 0
        %322 = vmatpush1.bf16.msra.mxu0 %v287
        %323 = vmatprep.subr.bf16.mxu0 0
        %324 = vmatpush1.bf16.msra.mxu0 %v288
        %325 = vmatprep.subr.bf16.mxu0 0
        %326 = vmatpush1.bf16.msra.mxu0 %v289
        %327 = vmatprep.subr.bf16.mxu0 0
        %328 = vmatpush1.bf16.msra.mxu0 0
        %329 = vmatprep.subr.bf16.mxu0 0
        %330 = vmatpush1.bf16.msra.mxu0 0
        %331 = vmatprep.subr.bf16.mxu0 0
        %332 = vmatpush1.bf16.msra.mxu0 0
        %333 = vmatprep.subr.bf16.mxu0 0
        %334 = vmatpush1.bf16.msra.mxu0 0
        %335 = vmatprep.subr.bf16.mxu0 0
        %336 = vmatpush1.bf16.msra.mxu0 0
        %337 = vmatprep.subr.bf16.mxu0 0
        %338 = vmatpush1.bf16.msra.mxu0 0
        %339 = vmatprep.subr.bf16.mxu0 0
        %340 = vmatpush1.bf16.msra.mxu0 0
        %341 = vmatprep.subr.bf16.mxu0 0
        %342 = vmatpush1.bf16.msra.mxu0 0
        %343 = vmatprep.subr.bf16.mxu0 0
        %344 = vmatpush1.bf16.msra.mxu0 0
        %345 = vmatprep.subr.bf16.mxu0 0
        %346 = vmatpush1.bf16.msra.mxu0 0
        %347 = vmatprep.subr.bf16.mxu0 0
        %348 = vmatpush1.bf16.msra.mxu0 0
        %349 = vmatprep.subr.bf16.mxu0 0
        %350 = vmatpush1.bf16.msra.mxu0 0
        %351 = vmatprep.subr.bf16.mxu0 0
        %352 = vmatpush1.bf16.msra.mxu0 0
        %353 = vmatprep.mubr.bf16.mxu0 0
        %354 = vmatmul.mubr.bf16.gmra.mrb[0].mxu0 %v295
        %v355 = vpop.f32.mrb[0].mxu0
        %v356 = vadd.f32 %v212, %v355
        %v357 = vpop.f32.mrb[0].mxu0
        %v358 = vpop.f32.mrb[0].mxu0
        %v359 = vadd.f32 %v213, %v358
        %v360 = vpop.f32.mrb[0].mxu0
        %361 = vmatprep.mubr.bf16.mxu0 0
        %362 = vmatmul.mubr.bf16.gmra.mrb[0].mxu0 %v298
        %v363 = vpop.f32.mrb[0].mxu0
        %v364 = vadd.f32 %v214, %v363
        %v365 = vpop.f32.mrb[0].mxu0
        %v366 = vpop.f32.mrb[0].mxu0
        %v367 = vadd.f32 %v215, %v366
        %v368 = vpop.f32.mrb[0].mxu0
        %369 = vmatprep.mubr.bf16.mxu0 0
        %370 = vmatmul.mubr.bf16.gmra.mrb[0].mxu0 %v301
        %v371 = vpop.f32.mrb[0].mxu0
        %v372 = vadd.f32 %v216, %v371
        %v373 = vpop.f32.mrb[0].mxu0
        %v374 = vpop.f32.mrb[0].mxu0
        %v375 = vadd.f32 %v217, %v374
        %v376 = vpop.f32.mrb[0].mxu0
        %377 = vmatprep.mubr.bf16.mxu0 0
        %378 = vmatmul.mubr.bf16.gmra.mrb[0].mxu0 %v304
        %v379 = vpop.f32.mrb[0].mxu0
        %v380 = vadd.f32 %v218, %v379
        %v381 = vpop.f32.mrb[0].mxu0
        %v382 = vpop.f32.mrb[0].mxu0
        %v383 = vadd.f32 %v219, %v382
        %v384 = vpop.f32.mrb[0].mxu0
        %385 = vmatprep.mubr.bf16.mxu0 0
        %386 = vmatmul.mubr.bf16.gmra.mrb[0].mxu0 %v307
        %v387 = vpop.f32.mrb[0].mxu0
        %v388 = vadd.f32 %v220, %v387
        %v389 = vpop.f32.mrb[0].mxu0
        %v390 = vpop.f32.mrb[0].mxu0
        %v391 = vadd.f32 %v221, %v390
        %v392 = vpop.f32.mrb[0].mxu0
        %393 = vmatprep.mubr.bf16.mxu0 0
        %394 = vmatmul.mubr.bf16.gmra.mrb[0].mxu0 %v310
        %v395 = vpop.f32.mrb[0].mxu0
        %v396 = vadd.f32 %v222, %v395
        %v397 = vpop.f32.mrb[0].mxu0
        %v398 = vpop.f32.mrb[0].mxu0
        %v399 = vadd.f32 %v223, %v398
        %v400 = vpop.f32.mrb[0].mxu0
        %401 = vmatprep.mubr.bf16.mxu0 0
        %402 = vmatmul.mubr.bf16.gmra.mrb[0].mxu0 %v313
        %v403 = vpop.f32.mrb[0].mxu0
        %v404 = vadd.f32 %v224, %v403
        %v405 = vpop.f32.mrb[0].mxu0
        %v406 = vpop.f32.mrb[0].mxu0
        %v407 = vadd.f32 %v225, %v406
        %v408 = vpop.f32.mrb[0].mxu0
        %409 = vmatprep.mubr.bf16.mxu0 0
        %410 = vmatmul.mubr.bf16.gmra.mrb[0].mxu0 %v316
        %v411 = vpop.f32.mrb[0].mxu0
        %v412 = vadd.f32 %v226, %v411
        %v413 = vpop.f32.mrb[0].mxu0
        %v414 = vpop.f32.mrb[0].mxu0
        %v415 = vadd.f32 %v227, %v414
        %v416 = vpop.f32.mrb[0].mxu0
        %417 = vmatprep.mubr.bf16.mxu0 0
        %418 = vmatmul.mubr.bf16.gmra.mrb[0].mxu0 %v319
        %v419 = vpop.f32.mrb[0].mxu0
        %v420 = vadd.f32 %v228, %v419
        %v421 = vpop.f32.mrb[0].mxu0
        %v422 = vpop.f32.mrb[0].mxu0
        %v423 = vadd.f32 %v229, %v422
        %v424 = vpop.f32.mrb[0].mxu0
        %425 = vdwg.mxu0
        %v426 = vpack.c.bf16 %v359, %v356
        %v427 = vpack.c.bf16 %v367, %v364
        %v428 = vpack.c.bf16 %v375, %v372
        %v429 = vpack.c.bf16 %v383, %v380
        %v430 = vpack.c.bf16 %v391, %v388
        %v431 = vpack.c.bf16 %v399, %v396
        %v432 = vpack.c.bf16 %v407, %v404
        %v433 = vpack.c.bf16 %v415, %v412
        %v434 = vpack.c.bf16 %v423, %v420
        %v444 = vunpack.c.l.b16 %v426
        %v445 = vunpack.c.h.b16 %v426
        %v446 = vunpack.c.l.b16 %v427
        %v447 = vunpack.c.h.b16 %v427
        %v448 = vunpack.c.l.b16 %v428
        %v449 = vunpack.c.h.b16 %v428
        %v450 = vunpack.c.l.b16 %v429
        %v451 = vunpack.c.h.b16 %v429
        %v452 = vunpack.c.l.b16 %v430
        %v453 = vunpack.c.h.b16 %v430
        %v454 = vunpack.c.l.b16 %v431
        %v455 = vunpack.c.h.b16 %v431
        %v456 = vunpack.c.l.b16 %v432
        %v457 = vunpack.c.h.b16 %v432
        %v458 = vunpack.c.l.b16 %v433
        %v459 = vunpack.c.h.b16 %v433
        %v460 = vunpack.c.l.b16 %v434
        %v461 = vunpack.c.h.b16 %v434
        %v462 = vpack.c.b16 %v444, %v444
        %v463 = vpack.c.b16 %v445, %v445
        %v464 = vpack.c.b16 %v446, %v446
        %v465 = vpack.c.b16 %v447, %v447
        %v466 = vpack.c.b16 %v448, %v448
        %v467 = vpack.c.b16 %v449, %v449
        %v468 = vpack.c.b16 %v450, %v450
        %v469 = vpack.c.b16 %v451, %v451
        %v470 = vpack.c.b16 %v452, %v452
        %v471 = vpack.c.b16 %v453, %v453
        %v472 = vpack.c.b16 %v454, %v454
        %v473 = vpack.c.b16 %v455, %v455
        %v474 = vpack.c.b16 %v456, %v456
        %v475 = vpack.c.b16 %v457, %v457
        %v476 = vpack.c.b16 %v458, %v458
        %v477 = vpack.c.b16 %v459, %v459
        %v478 = vpack.c.b16 %v460, %v460
        %v479 = vpack.c.b16 %v461, %v461
        %498 = vst [vmem:[%s179] sm:$0xf] %v462
        %499 = vst [vmem:[%s179 + $0x4] sm:$0xf] %v463
        %500 = vst [vmem:[%s179 + $0x8] sm:$0xf] %v464
        %501 = vst [vmem:[%s179 + $0xc] sm:$0xf] %v465
        %502 = vst [vmem:[%s179 + $0x10] sm:$0xf] %v466
        %503 = vst [vmem:[%s179 + $0x14] sm:$0xf] %v467
        %504 = vst [vmem:[%s179 + $0x18] sm:$0xf] %v468
        %505 = vst [vmem:[%s179 + $0x1c] sm:$0xf] %v469
        %506 = vst [vmem:[%s179 + $0x20] sm:$0xf] %v470
        %507 = vst [vmem:[%s179 + $0x24] sm:$0xf] %v471
        %508 = vst [vmem:[%s179 + $0x28] sm:$0xf] %v472
        %509 = vst [vmem:[%s179 + $0x2c] sm:$0xf] %v473
        %510 = vst [vmem:[%s179 + $0x30] sm:$0xf] %v474
        %511 = vst [vmem:[%s179 + $0x34] sm:$0xf] %v475
        %512 = vst [vmem:[%s179 + $0x38] sm:$0xf] %v476
        %513 = vst [vmem:[%s179 + $0x3c] sm:$0xf] %v477
        %514 = vst [vmem:[%s179 + $0x40] sm:$0xf] %v478
        %515 = vst [vmem:[%s179 + $0x44] sm:$0xf] %v479
        %s516 = sand.u32 %s94, 1
        %s517 = scalar_lea.sflag [#allocation4], %s516
        %s518 = sand.u32 %s94, 1
        %s519 = smul.addr %s518, 72
        %s520 = scalar_lea.vmem [#allocation5], %s519
        // Predicated region
        $region37: #{tpu_custom_call.1} parent=31 // pred_check
          %p521 = pneg %p104
        $region38: #{tpu_custom_call.1} parent=31 // pred_check_branch
          %523 = sbr.rel (%p521) target = $region40
        $region39: #{tpu_custom_call.1} parent=31 // pred_region
          %s524 = smul.u32 18, %s18
          %s526 = ssub.s32 1152, 1152
          %527 = vsyncadd %s517, %s526
          %s528 = smul.addr %s524, 64
          %s529 = scalar_lea.hbm %s3, %s528
          %s530 = sshll.u32 %s520, 4
          %s531 = int_to_ptr.vmem [resolvable:$true] %s530
          %536 = dma.vmem_to_hbm [thread:$0]  %s531, 1152, %s529, %s517, 64, 64, 4
        $region40: #{tpu_custom_call.1} parent=31 // pred_fallthru
          _
      $region32: #{tpu_custom_call.1} parent=5 // pred_fallthru
        _
      %p537 = scmp.le.s32.totalorder 2, %s13
      // Predicated region
      $region41: #{tpu_custom_call.1} parent=5 // pred_check
        %p538 = pneg %p537
      $region42: #{tpu_custom_call.1} parent=5 // pred_check_branch
        %540 = sbr.rel (%p538) target = $region44
      $region43: #{tpu_custom_call.1} parent=5 // pred_region
        %s541 = ssub.s32 %s13, 2
        // Predicated region
        $region45: #{tpu_custom_call.1} parent=43 // pred_check
          %p542 = pneg %p110
        $region46: #{tpu_custom_call.1} parent=43 // pred_check_branch
          %544 = sbr.rel (%p542) target = $region48
        $region47: #{tpu_custom_call.1} parent=43 // pred_region
          %s545 = sand.u32 %s95, 1
          %s546 = scalar_lea.sflag [#allocation4], %s545
          %s547 = sand.u32 %s95, 1
          %s548 = smul.addr %s547, 72
          %s549 = scalar_lea.vmem [#allocation5], %s548
          %550 = dma.done %s546, 1152
        $region48: #{tpu_custom_call.1} parent=43 // pred_fallthru
          _
      $region44: #{tpu_custom_call.1} parent=5 // pred_fallthru
        _
    $region6: #{tpu_custom_call.1} parent=1 // loop_footer
      %s17 = sadd.s32 1, %s13
    $region7: #{tpu_custom_call.1} parent=1 // loop_footer_branch
      %12 = sbr.rel target = $region3
    $region8: #{tpu_custom_call.1} parent=1 // loop_exit
      _
    %551 = vsyncpa [#allocation3], 1
    %s552 = scalar_lea.sflag [#allocation3], 1
    %553 = vsyncpa %s552, 1
    %554 = vsyncpa [#allocation4], 1
    %s555 = scalar_lea.sflag [#allocation4], 1
    %556 = vsyncpa %s555, 1

</llo_original>
